<compile_context>
chip_gen: v7x
topology: tpu7x:2x2x1
jax: 0.10.0
libtpu: 0.0.40
codegen_flags: <defaults>
</compile_context>

<pallas_src>
import jax
import jax.numpy as jnp
from jax.experimental import pallas as pl
from jax.experimental.pallas import tpu as pltpu

# Total pipelined-VMEM budget for one pallas_call (all buffers, both pipeline
# slots, plus in-kernel f32 temporaries).  10 MiB stays under every
# generation's default scoped-VMEM limit (v5e 16 MiB, v6e/v7x 32 MiB).
_VMEM_BUDGET_BYTES = 10 * 1024 * 1024
_MIN_GRID_STEPS = 4  # keep the pipeline (and v7x's 2 TCs) busy when N allows


def _round_up_8(x: int) -> int:
    return (x + 7) // 8 * 8


def _summarize_kernel(feat_ref, mask_ref, out_ref):
    """out[n, d] = sum_s feat[n, s, d] / max(sum_s mask[n, s], 1)."""
    # Valid-position count; the (bn, S) mask tile is tiny, cast in-kernel.
    m = mask_ref[...].astype(jnp.float32)                       # (bn, S)
    seq_len = jnp.sum(m, axis=-1, keepdims=True)                # (bn, 1)
    seq_len = jnp.where(seq_len == 0.0, 1.0, seq_len)           # clamp to 1

    # Fused upcast + sublane reduce over the sequence axis: f32 accumulation
    # without keeping a separate f32 copy of the full (bn, S, D) tile alive.
    xsum = jnp.sum(feat_ref[...], axis=1, dtype=jnp.float32)    # (bn, D)

    inv = pl.reciprocal(seq_len)                                # EUP slot
    out_ref[...] = (xsum * inv).astype(out_ref.dtype)


def _choose_block_rows(n: int, s: int, d: int,
                       feat_itemsize: int, mask_itemsize: int,
                       out_itemsize: int) -> int:
    """Row-tile size: as many rows as fit the VMEM budget, >=4 grid steps."""
    per_row = (2 * s * d * feat_itemsize   # feat tile, double-buffered
               + s * d * 4                 # worst-case f32 reduce temporary
               + 2 * s * mask_itemsize     # mask tile, double-buffered
               + 2 * d * out_itemsize      # out tile, double-buffered
               + d * 4)                    # f32 row accumulator
    br = max(8, _VMEM_BUDGET_BYTES // max(per_row, 1))
    # Keep at least _MIN_GRID_STEPS grid steps when N is large enough so the
    # "parallel" axis actually shards across v7x's two TensorCores and the
    # DMA pipeline has something to overlap with.
    if n >= _MIN_GRID_STEPS * 8:
        br = min(br, _round_up_8(pl.cdiv(n, _MIN_GRID_STEPS)))
    br = min(br, n)
    if br < n:
        # out/mask blocks put br in the second-to-last dim: multiple of 8
        br = max(8, (br // 8) * 8)
    return int(br)


@jax.jit
def summarize_feature(feature_val: jax.Array, mask: jax.Array) -> jax.Array:
    """Pallas mean-by-valid-count pooling.

    feature_val: [N, S, D] (any float dtype), mask: [N, S, 1] or [N, S]
    (any numeric dtype).  Returns feature_val.dtype [N, D].
    """
    assert feature_val.ndim == 3, feature_val.shape
    n, s, d = feature_val.shape
    mask2d = mask.reshape(n, s)  # native dtype; cast happens inside the kernel

    out_dtype = feature_val.dtype
    block_rows = _choose_block_rows(
        n, s, d,
        feature_val.dtype.itemsize,
        mask2d.dtype.itemsize,
        jnp.dtype(out_dtype).itemsize,
    )
    grid = (pl.cdiv(n, block_rows),)

    # TODO(synk): D not a multiple of 128 (e.g. D=64) leaves lanes half-masked;
    # fold sequence pairs into lanes or pad D upstream for full lane density.
    return pl.pallas_call(
        _summarize_kernel,
        out_shape=jax.ShapeDtypeStruct((n, d), out_dtype),
        grid=grid,
        in_specs=[
            pl.BlockSpec((block_rows, s, d), lambda i: (i, 0, 0)),
            pl.BlockSpec((block_rows, s), lambda i: (i, 0)),
        ],
        out_specs=pl.BlockSpec((block_rows, d), lambda i: (i, 0)),
        compiler_params=pltpu.CompilerParams(
            dimension_semantics=("parallel",),
        ),
    )(feature_val, mask2d)


class ItemFeatureSummarizer:
    """JAX/Pallas port of omnisearchsage.model.ItemFeatureSummarizer.

    No learnable parameters. For each feature name, consumes `<name>_feat`
    and `<name>_mask` and emits `<name>` = seq-sum / valid-count pooling.
    """

    def __init__(self, features_to_summarize):
        self.feature_to_summarize = list(features_to_summarize)

    def extra_repr(self) -> str:
        return f"feature_to_summarize={self.feature_to_summarize}"

    def __call__(self, feats):
        feats = dict(feats)  # shallow copy; pop like the torch in-place version
        # TODO(synk): identically-shaped features could be stacked along N into
        # one pallas_call to amortize per-feature dispatch overhead.
        for feat in self.feature_to_summarize:
            mask = feats.pop(feat + "_mask")
            feature_val = feats.pop(feat + "_feat")
            assert feature_val.ndim == 3, (feat, feature_val.shape)
            feats[feat] = summarize_feature(feature_val, mask)
        return feats


if __name__ == "__main__":
    key = jax.random.PRNGKey(0)
    k1, k2, k3, k4 = jax.random.split(key, 4)

    # Small demo shapes: 8 items, seq lens 12 / 5, embedding dims 128 / 64.
    N, S1, D1 = 8, 12, 128
    N2, S2, D2 = 8, 5, 64

    feat_a = jax.random.normal(k1, (N, S1, D1), dtype=jnp.float32).astype(jnp.bfloat16)
    mask_a = (jax.random.uniform(k2, (N, S1, 1)) > 0.4).astype(jnp.float32)
    mask_a = mask_a.at[0].set(0.0)  # one all-zero row exercises the seq_len clamp

    feat_b = jax.random.normal(k3, (N2, S2, D2), dtype=jnp.float32)
    mask_b = (jax.random.uniform(k4, (N2, S2, 1)) > 0.3).astype(jnp.float32)

    feats = {
        "sig_a_feat": feat_a,
        "sig_a_mask": mask_a,
        "sig_b_feat": feat_b,
        "sig_b_mask": mask_b,
        "passthrough": jnp.arange(N, dtype=jnp.int32),
    }

    summarizer = ItemFeatureSummarizer(["sig_a", "sig_b"])
    out_feats = summarizer(feats)
    out_a = jax.block_until_ready(out_feats["sig_a"])
    out_b = jax.block_until_ready(out_feats["sig_b"])

    # Reference (plain JAX, mirrors the torch semantics; f32 accumulation).
    def ref(feature_val, mask):
        sl = jnp.sum(mask.reshape(mask.shape[0], -1).astype(jnp.float32),
                     axis=1, keepdims=True)
        sl = jnp.where(sl == 0.0, 1.0, sl)
        return jnp.sum(feature_val.astype(jnp.float32), axis=1) / sl

    ref_a = ref(feat_a, mask_a)
    ref_b = ref(feat_b, mask_b)

    assert out_a.shape == (N, D1) and out_a.dtype == jnp.bfloat16
    assert out_b.shape == (N2, D2) and out_b.dtype == jnp.float32
    # bf16 output: compare upcast against f32 reference with bf16-level tolerance
    assert jnp.allclose(out_a.astype(jnp.float32), ref_a, atol=2e-2, rtol=2e-2)
    assert jnp.allclose(out_b, ref_b, atol=1e-5, rtol=1e-5)
    # consumed keys removed, untouched keys pass through unchanged
    assert "sig_a_feat" not in out_feats and "sig_a_mask" not in out_feats
    assert "sig_b_feat" not in out_feats and "sig_b_mask" not in out_feats
    assert jnp.array_equal(out_feats["passthrough"], feats["passthrough"])

    print("KERNEL_OK")
</pallas_src>

<mosaic_0001>
module attributes {stable_mosaic.version = 11 : i64} {
  func.func @_summarize_kernel(%arg0: i32, %arg1: memref<8x12x128xbf16, #tpu.memory_space<vmem>>, %arg2: memref<8x12xf32, #tpu.memory_space<vmem>>, %arg3: memref<8x128xbf16, #tpu.memory_space<vmem>>) attributes {dimension_semantics = [#tpu.dimension_semantics<parallel>], iteration_bounds = array<i64: 1>, scalar_prefetch = 0 : i64, scratch_operands = 0 : i64, tpu.core_type = #tpu.core_type<tc>, window_params = [{transform_indices = @transform_0, window_bounds = array<i64: 8, 12, 128>}, {transform_indices = @transform_1, window_bounds = array<i64: 8, 12>}, {transform_indices = @transform_2, window_bounds = array<i64: 8, 128>}]} {
    %c0 = arith.constant 0 : index
    %c0_0 = arith.constant 0 : index
    %0 = vector.load %arg2[%c0, %c0_0] : memref<8x12xf32, #tpu.memory_space<vmem>>, vector<8x12xf32>
    %cst = arith.constant dense<0.000000e+00> : vector<8xf32>
    %1 = vector.multi_reduction <add>, %0, %cst [1] : vector<8x12xf32> to vector<8xf32>
    %2 = vector.shape_cast %1 : vector<8xf32> to vector<8x1xf32>
    %cst_1 = arith.constant 0.000000e+00 : f32
    %3 = vector.broadcast %cst_1 : f32 to vector<8x1xf32>
    %4 = arith.cmpf oeq, %2, %3 : vector<8x1xf32>
    %cst_2 = arith.constant 1.000000e+00 : f32
    %5 = vector.broadcast %cst_2 : f32 to vector<8x1xf32>
    %6 = arith.select %4, %5, %2 : vector<8x1xi1>, vector<8x1xf32>
    %c0_3 = arith.constant 0 : index
    %c0_4 = arith.constant 0 : index
    %c0_5 = arith.constant 0 : index
    %7 = vector.load %arg1[%c0_3, %c0_4, %c0_5] : memref<8x12x128xbf16, #tpu.memory_space<vmem>>, vector<8x12x128xbf16>
    %8 = arith.extf %7 : vector<8x12x128xbf16> to vector<8x12x128xf32>
    %cst_6 = arith.constant dense<0.000000e+00> : vector<8x128xf32>
    %9 = vector.multi_reduction <add>, %8, %cst_6 [1] : vector<8x12x128xf32> to vector<8x128xf32>
    %10 = tpu.reciprocal %6 : vector<8x1xf32> -> vector<8x1xf32>
    %11 = vector.broadcast %10 : vector<8x1xf32> to vector<8x128xf32>
    %12 = arith.mulf %9, %11 : vector<8x128xf32>
    %13 = arith.truncf %12 : vector<8x128xf32> to vector<8x128xbf16>
    %c0_7 = arith.constant 0 : index
    %c0_8 = arith.constant 0 : index
    %14 = vector.load %arg3[%c0_7, %c0_8] : memref<8x128xbf16, #tpu.memory_space<vmem>>, vector<8x128xbf16>
    tpu.vector_store %arg3[%c0_7, %c0_8], %13 {strides = array<i32>} : memref<8x128xbf16, #tpu.memory_space<vmem>>, vector<8x128xbf16>,
    return
  }
  func.func @transform_0(%arg0: i32) -> (i32, i32, i32) {
    %c0_i32 = arith.constant 0 : i32
    %c0_i32_0 = arith.constant 0 : i32
    %c0_i32_1 = arith.constant 0 : i32
    return %arg0, %c0_i32, %c0_i32_0 : i32, i32, i32
  }
  func.func @transform_1(%arg0: i32) -> (i32, i32) {
    %c0_i32 = arith.constant 0 : i32
    %c0_i32_0 = arith.constant 0 : i32
    return %arg0, %c0_i32 : i32, i32
  }
  func.func @transform_2(%arg0: i32) -> (i32, i32) {
    %c0_i32 = arith.constant 0 : i32
    %c0_i32_0 = arith.constant 0 : i32
    return %arg0, %c0_i32 : i32, i32
  }
}

</mosaic_0001>

<llo_original>
// kernel: summarize_feature.1
$region0: #{summarize_feature.1}
  #allocation0 [shape = 'u32[]', space=smem, size = 0x4, offset = 0x4, fixed_abs, tag = 'smem constant byte address 0x4 - core index']
  #allocation1 [shape = 'u32[144,128]{1,0:T(1,128)}', space=vmem, size = 0x12000, scoped, tag = 'internal scratch']
  %s0 = inlined_call_operand.vmem [shape: bf16[8,12,128], index: 0, kind: input, shape index: {}]
  %s1 = inlined_call_operand.vmem [shape: f32[8,12], index: 1, kind: input, shape index: {}]
  %s2 = inlined_call_operand.hbm [shape: bf16[8,128], index: 2, kind: output, shape index: {}]
  %s3 = sld [smem:[#allocation0]]
  $region18: #{summarize_feature.1} parent=0
    _
  %s5 = ssub.s32 1, %s3
  %s6 = scalar_select 0, %s5, %s3
  $region1: #{summarize_feature.1} parent=0
    #allocation2 [shape = 'u8[2048]{0}', space=vmem, size = 0x800, scoped, tag = 'output window, operand 0, single buffered']
    #allocation3 [shape = 's32[1]{0}', space=sflag, size = 0x4, scoped, tag = 'scoped memory for summarize_feature.1']
    %7 = vsyncpa [#allocation3], 0
    // Predicated region
    $region2: #{summarize_feature.1} parent=1 // pred_check
      _
    $region3: #{summarize_feature.1} parent=1 // pred_check_branch
      %9 = sbr.rel (0) target = $region5
    $region4: #{summarize_feature.1} parent=1 // pred_region
      _
    $region5: #{summarize_feature.1} parent=1 // pred_fallthru
      _
    // Predicated region
    $region6: #{summarize_feature.1} parent=1 // pred_check
      _
    $region7: #{summarize_feature.1} parent=1 // pred_check_branch
      %11 = sbr.rel (0) target = $region9
    $region8: #{summarize_feature.1} parent=1 // pred_region
      _
    $region9: #{summarize_feature.1} parent=1 // pred_fallthru
      _
    %v12 = vld [vmem:[%s1] sm:$0xff]
    %vm13 = vcmask 97280
    %v14 = vsel %vm13, %v12, 0.0
    %15 = vadd.xlane.f32.xlu0 %v14
    %v16 = vpop.xlane.xlu0 %15
    %vm17 = vcmp.eq.f32.partialorder %v16, 0.0
    %v18 = vsel %vm17, 1.0, %v16
    %v19 = vld [vmem:[%s0] sm:$0xf]
    %v20 = vld [vmem:[%s0 + $0x4] sm:$0x3]
    %v21 = vld [vmem:[%s0 + $0x8] sm:$0xf]
    %v22 = vld [vmem:[%s0 + $0xc] sm:$0x3]
    %v23 = vld [vmem:[%s0 + $0x10] sm:$0xf]
    %v24 = vld [vmem:[%s0 + $0x14] sm:$0x3]
    %v25 = vld [vmem:[%s0 + $0x18] sm:$0xf]
    %v26 = vld [vmem:[%s0 + $0x1c] sm:$0x3]
    %v27 = vld [vmem:[%s0 + $0x20] sm:$0xf]
    %v28 = vld [vmem:[%s0 + $0x24] sm:$0x3]
    %v29 = vld [vmem:[%s0 + $0x28] sm:$0xf]
    %v30 = vld [vmem:[%s0 + $0x2c] sm:$0x3]
    %v31 = vld [vmem:[%s0 + $0x30] sm:$0xf]
    %v32 = vld [vmem:[%s0 + $0x34] sm:$0x3]
    %v33 = vld [vmem:[%s0 + $0x38] sm:$0xf]
    %v34 = vld [vmem:[%s0 + $0x3c] sm:$0x3]
    %v35 = vunpack.c.l.bf16 %v19
    %v36 = vunpack.c.l.bf16 %v20
    %v37 = vunpack.c.l.bf16 %v21
    %v38 = vunpack.c.l.bf16 %v22
    %v39 = vunpack.c.l.bf16 %v23
    %v40 = vunpack.c.l.bf16 %v24
    %v41 = vunpack.c.l.bf16 %v25
    %v42 = vunpack.c.l.bf16 %v26
    %v43 = vunpack.c.l.bf16 %v27
    %v44 = vunpack.c.l.bf16 %v28
    %v45 = vunpack.c.l.bf16 %v29
    %v46 = vunpack.c.l.bf16 %v30
    %v47 = vunpack.c.l.bf16 %v31
    %v48 = vunpack.c.l.bf16 %v32
    %v49 = vunpack.c.l.bf16 %v33
    %v50 = vunpack.c.l.bf16 %v34
    %vm51 = vcmask 1043456
    %v52 = vsel %vm51, %v36, 0.0
    %v53 = vadd.f32 %v35, %v52
    %v54 = vrot.slane %v53, 4
    %v55 = vadd.f32 %v53, %v54
    %v56 = vrot.slane %v55, 2
    %v57 = vadd.f32 %v55, %v56
    %v58 = vrot.slane %v57, 1
    %v59 = vadd.f32 %v57, %v58
    %v60 = vsel %vm51, %v38, 0.0
    %v61 = vadd.f32 %v37, %v60
    %v62 = vrot.slane %v61, 4
    %v63 = vadd.f32 %v61, %v62
    %v64 = vrot.slane %v63, 2
    %v65 = vadd.f32 %v63, %v64
    %v66 = vrot.slane %v65, 1
    %v67 = vadd.f32 %v65, %v66
    %v68 = vsel %vm51, %v40, 0.0
    %v69 = vadd.f32 %v39, %v68
    %v70 = vrot.slane %v69, 4
    %v71 = vadd.f32 %v69, %v70
    %v72 = vrot.slane %v71, 2
    %v73 = vadd.f32 %v71, %v72
    %v74 = vrot.slane %v73, 1
    %v75 = vadd.f32 %v73, %v74
    %v76 = vsel %vm51, %v42, 0.0
    %v77 = vadd.f32 %v41, %v76
    %v78 = vrot.slane %v77, 4
    %v79 = vadd.f32 %v77, %v78
    %v80 = vrot.slane %v79, 2
    %v81 = vadd.f32 %v79, %v80
    %v82 = vrot.slane %v81, 1
    %v83 = vadd.f32 %v81, %v82
    %v84 = vsel %vm51, %v44, 0.0
    %v85 = vadd.f32 %v43, %v84
    %v86 = vrot.slane %v85, 4
    %v87 = vadd.f32 %v85, %v86
    %v88 = vrot.slane %v87, 2
    %v89 = vadd.f32 %v87, %v88
    %v90 = vrot.slane %v89, 1
    %v91 = vadd.f32 %v89, %v90
    %v92 = vsel %vm51, %v46, 0.0
    %v93 = vadd.f32 %v45, %v92
    %v94 = vrot.slane %v93, 4
    %v95 = vadd.f32 %v93, %v94
    %v96 = vrot.slane %v95, 2
    %v97 = vadd.f32 %v95, %v96
    %v98 = vrot.slane %v97, 1
    %v99 = vadd.f32 %v97, %v98
    %v100 = vsel %vm51, %v48, 0.0
    %v101 = vadd.f32 %v47, %v100
    %v102 = vrot.slane %v101, 4
    %v103 = vadd.f32 %v101, %v102
    %v104 = vrot.slane %v103, 2
    %v105 = vadd.f32 %v103, %v104
    %v106 = vrot.slane %v105, 1
    %v107 = vadd.f32 %v105, %v106
    %v108 = vsel %vm51, %v50, 0.0
    %v109 = vadd.f32 %v49, %v108
    %v110 = vrot.slane %v109, 4
    %v111 = vadd.f32 %v109, %v110
    %v112 = vrot.slane %v111, 2
    %v113 = vadd.f32 %v111, %v112
    %v114 = vrot.slane %v113, 1
    %v115 = vadd.f32 %v113, %v114
    %v116 = vrcp.pop %v18
    %v118 = vrot.slane %v116, 1
    %v119 = vrot.slane %v116, 2
    %v120 = vrot.slane %v116, 3
    %v121 = vrot.slane %v116, 4
    %v122 = vrot.slane %v116, 5
    %v123 = vrot.slane %v116, 6
    %v124 = vrot.slane %v116, 7
    %v133 = vmul.f32 %v59, %v116
    %v134 = vmul.f32 %v67, %v118
    %v135 = vmul.f32 %v75, %v119
    %v136 = vmul.f32 %v83, %v120
    %v137 = vmul.f32 %v91, %v121
    %v138 = vmul.f32 %v99, %v122
    %v139 = vmul.f32 %v107, %v123
    %v140 = vmul.f32 %v115, %v124
    %v141 = vpack.c.bf16 %v133, %v133
    %v142 = vpack.c.bf16 %v134, %v134
    %v143 = vpack.c.bf16 %v135, %v135
    %v144 = vpack.c.bf16 %v136, %v136
    %v145 = vpack.c.bf16 %v137, %v137
    %v146 = vpack.c.bf16 %v138, %v138
    %v147 = vpack.c.bf16 %v139, %v139
    %v148 = vpack.c.bf16 %v140, %v140
    %v157 = vunpack.c.l.b16 %v141
    %v158 = vunpack.c.l.b16 %v142
    %v159 = vunpack.c.l.b16 %v143
    %v160 = vunpack.c.l.b16 %v144
    %v161 = vunpack.c.l.b16 %v145
    %v162 = vunpack.c.l.b16 %v146
    %v163 = vunpack.c.l.b16 %v147
    %v164 = vunpack.c.l.b16 %v148
    %v165 = vpack.c.b16 %v157, %v157
    %v166 = vpack.c.b16 %v158, %v158
    %v167 = vpack.c.b16 %v159, %v159
    %v168 = vpack.c.b16 %v160, %v160
    %v169 = vpack.c.b16 %v161, %v161
    %v170 = vpack.c.b16 %v162, %v162
    %v171 = vpack.c.b16 %v163, %v163
    %v172 = vpack.c.b16 %v164, %v164
    %v173 = vunpack.c.l.b16 %v165
    %v174 = vunpack.c.l.b16 %v166
    %v175 = vunpack.c.l.b16 %v167
    %v176 = vunpack.c.l.b16 %v168
    %v177 = vunpack.c.l.b16 %v169
    %v178 = vunpack.c.l.b16 %v170
    %v179 = vunpack.c.l.b16 %v171
    %v180 = vunpack.c.l.b16 %v172
    %v181 = vrot.slane %v174, 7
    %vm182 = vcmask 1041409
    %v183 = vsel %vm182, %v181, %v173
    %v184 = vrot.slane %v175, 6
    %vm185 = vcmask 1042434
    %v186 = vsel %vm185, %v184, %v183
    %v187 = vrot.slane %v176, 5
    %vm188 = vcmask 1043459
    %v189 = vsel %vm188, %v187, %v186
    %v190 = vrot.slane %v177, 4
    %vm191 = vcmask 1044484
    %v192 = vsel %vm191, %v190, %v189
    %v193 = vrot.slane %v178, 3
    %vm194 = vcmask 1045509
    %v195 = vsel %vm194, %v193, %v192
    %v196 = vrot.slane %v179, 2
    %vm197 = vcmask 1046534
    %v198 = vsel %vm197, %v196, %v195
    %v199 = vrot.slane %v180, 1
    %vm200 = vcmask 1047559
    %v201 = vsel %vm200, %v199, %v198
    %v202 = vpack.c.b16 %v201, %v201
    %204 = vst [vmem:[#allocation2] sm:$0xf] %v202
    // Predicated region
    $region10: #{summarize_feature.1} parent=1 // pred_check
      _
    $region11: #{summarize_feature.1} parent=1 // pred_check_branch
      %206 = sbr.rel (0) target = $region13
    $region12: #{summarize_feature.1} parent=1 // pred_region
      %s208 = ssub.s32 64, 64
      %209 = vsyncadd [#allocation3], %s208
      %s211 = sshll.u32 [#allocation2], 4
      %s212 = int_to_ptr.vmem [resolvable:$true] %s211
      %214 = dma.vmem_to_hbm [thread:$0]  %s212, 64, %s2, [#allocation3]
    $region13: #{summarize_feature.1} parent=1 // pred_fallthru
      _
    // Predicated region
    $region14: #{summarize_feature.1} parent=1 // pred_check
      _
    $region15: #{summarize_feature.1} parent=1 // pred_check_branch
      %216 = sbr.rel (0) target = $region17
    $region16: #{summarize_feature.1} parent=1 // pred_region
      %217 = dma.done [#allocation3], 64
    $region17: #{summarize_feature.1} parent=1 // pred_fallthru
      _
    %218 = vsyncpa [#allocation3], 1

</llo_original>
